<compile_context>
chip_gen: v7x
topology: tpu7x:2x2x1
jax: 0.10.0
libtpu: 0.0.40
codegen_flags: <defaults>
</compile_context>

<pallas_src>
import functools
import math

import jax
import jax.numpy as jnp
from jax.experimental import pallas as pl
from jax.experimental.pallas import tpu as pltpu


# ---------------------------------------------------------------------------
# Main path: one fused kernel per (bt, C, HW) batch tile.
# ---------------------------------------------------------------------------
def _se_kernel(x_ref, w1_ref, b1_ref, w2_ref, b2_ref, o_ref, *, inv_hw):
    # x_ref / o_ref: (bt, C, HW); w1_ref: (C, Cr); b1_ref: (1, Cr);
    # w2_ref: (Cr, C); b2_ref: (1, C).
    # 1) Global average pool over the spatial (lane) axis.
    y = jnp.sum(x_ref[...], axis=2) * inv_hw                           # (bt, C)
    # 2) fc1 + ReLU  (weights pre-transposed: y @ W1^T)
    h = jnp.dot(y, w1_ref[...], preferred_element_type=jnp.float32) + b1_ref[...]
    h = jnp.maximum(h, 0.0)                                            # (bt, Cr)
    # 3) fc2 + tanh
    s = jnp.dot(h, w2_ref[...], preferred_element_type=jnp.float32) + b2_ref[...]
    s = jnp.tanh(s)                                                    # (bt, C)
    # 4) Channel-wise scaling (re-reads the VMEM tile; streams to the output).
    o_ref[...] = x_ref[...] * s[:, :, None]


# ---------------------------------------------------------------------------
# Fallback path (a single image exceeds the VMEM tile budget):
#   pass 1: spatially-chunked pooled sum (pl.when accumulator) + tiny FCs
#   pass 2: spatially-chunked channel-wise scaling
# ---------------------------------------------------------------------------
def _pool_fc_kernel(x_ref, w1_ref, b1_ref, w2_ref, b2_ref, s_ref, acc_ref,
                    *, inv_hw, hw, chunk):
    j = pl.program_id(1)

    @pl.when(j == 0)
    def _():
        acc_ref[...] = jnp.zeros_like(acc_ref)

    # Mask lanes past the true spatial extent (last chunk may be ragged and
    # the out-of-bounds reads are unspecified).
    pos = j * chunk + jax.lax.broadcasted_iota(jnp.int32, x_ref.shape, 2)
    xv = jnp.where(pos < hw, x_ref[...], 0.0)
    acc_ref[...] += jnp.sum(xv, axis=2)                                 # (1, C)

    @pl.when(j == pl.num_programs(1) - 1)
    def _():
        y = acc_ref[...] * inv_hw                                       # (1, C)
        h = jnp.dot(y, w1_ref[...], preferred_element_type=jnp.float32) + b1_ref[...]
        h = jnp.maximum(h, 0.0)
        s = jnp.tanh(jnp.dot(h, w2_ref[...], preferred_element_type=jnp.float32)
                     + b2_ref[...])                                     # (1, C)
        s_ref[...] = s[:, :, None]                                      # (1, C, 1)


def _scale_kernel(x_ref, s_ref, o_ref):
    # x_ref / o_ref: (1, C, chunk); s_ref: (1, C, 1)
    o_ref[...] = x_ref[...] * s_ref[...]


# ---------------------------------------------------------------------------
# Sizing helpers.
# ---------------------------------------------------------------------------
def _vmem_budgets():
    try:
        vmem_cap = int(pltpu.get_tpu_info().vmem_capacity_bytes)
    except Exception:  # conservative fallback (v7x per-TC VMEM)
        vmem_cap = 64 << 20
    # x/out pipeline buffers capped at <= ~16 MiB total (4 buffers x <= 4 MiB):
    # ~1 MiB tiles already sit at ~85% of the HBM roofline, and the small
    # envelope leaves headroom inside v7x's 64 MiB VMEM per TensorCore.
    tile_budget = min(vmem_cap // 4, 16 << 20)
    return vmem_cap, tile_budget


def _pick_batch_tile(B, bytes_per_image, tile_budget):
    """Largest divisor of B whose double-buffered in+out tiles fit tile_budget.

    Prefers a grid of >= 4 steps (>= 2 per TC on v7x) while each tile stays
    >= ~1 MiB, then >= 2 steps while tiles stay >= 512 KiB; otherwise keeps
    the largest fitting tile (small inputs are not split just to deepen the
    grid, which would only add per-step overhead on single-TC chips).
    Returns 0 if even a single image does not fit (caller uses the fallback).
    """
    divisors = [d for d in range(1, B + 1) if B % d == 0]
    fitting = [d for d in divisors if 4 * d * bytes_per_image <= tile_budget]
    if not fitting:
        return 0
    for d in reversed(fitting):                      # largest first
        if B // d >= 4 and d * bytes_per_image >= (1 << 20):
            return d
    for d in reversed(fitting):
        if B // d >= 2 and d * bytes_per_image >= (512 << 10):
            return d
    return fitting[-1]


# ---------------------------------------------------------------------------
# Public wrapper.
# ---------------------------------------------------------------------------
def se_block(x, w1_t, b1, w2_t, b2, *, force_spatial_tiling=False,
             spatial_chunk=None, donate_x=False):
    """SEBlock forward.  x: (B, C, H, W) f32; w1_t: (C, Cr); w2_t: (Cr, C)."""
    B, C, H, W = x.shape
    HW = H * W
    Cr = w1_t.shape[1]
    itemsize = 4

    x_flat = x.reshape(B, C, HW)   # no spatial padding: full-HW last block dim
    b1_2d = b1.reshape(1, Cr)
    b2_2d = b2.reshape(1, C)
    inv_hw = 1.0 / float(HW)

    vmem_cap, tile_budget = _vmem_budgets()
    weight_bytes = (C * Cr + Cr + Cr * C + C) * itemsize
    per_image = C * HW * itemsize
    # Weights/biases stay (cheaply) double-buffered; charge them to the budget.
    avail = max(tile_budget - 2 * weight_bytes, 1)

    bt = 0 if force_spatial_tiling else _pick_batch_tile(B, per_image, avail)

    if bt > 0:
        # ------------------------- main path ------------------------------
        pipeline_bytes = 4 * bt * per_image + 2 * weight_bytes
        vmem_limit = int(min(max(pipeline_bytes + (4 << 20), 16 << 20),
                             min(40 << 20, vmem_cap * 3 // 4)))
        cost = pl.CostEstimate(
            flops=2 * B * C * HW + 4 * B * C * Cr,
            transcendentals=B * C,
            bytes_accessed=2 * B * per_image + weight_bytes)

        out_flat = pl.pallas_call(
            functools.partial(_se_kernel, inv_hw=inv_hw),
            out_shape=jax.ShapeDtypeStruct((B, C, HW), jnp.float32),
            grid_spec=pltpu.PrefetchScalarGridSpec(
                num_scalar_prefetch=0,
                grid=(B // bt,),
                in_specs=[
                    pl.BlockSpec((bt, C, HW), lambda i: (i, 0, 0)),   # x tile
                    pl.BlockSpec((C, Cr), lambda i: (0, 0)),          # fc1 W^T
                    pl.BlockSpec((1, Cr), lambda i: (0, 0)),          # fc1 bias
                    pl.BlockSpec((Cr, C), lambda i: (0, 0)),          # fc2 W^T
                    pl.BlockSpec((1, C), lambda i: (0, 0)),           # fc2 bias
                ],
                out_specs=pl.BlockSpec((bt, C, HW), lambda i: (i, 0, 0)),
            ),
            compiler_params=pltpu.CompilerParams(
                dimension_semantics=("parallel",),
                vmem_limit_bytes=vmem_limit),
            cost_estimate=cost,
            input_output_aliases={0: 0} if donate_x else {},
        )(x_flat, w1_t, b1_2d, w2_t, b2_2d)
        return out_flat.reshape(B, C, H, W)

    # --------------------- spatially-chunked fallback ----------------------
    if spatial_chunk is not None:
        chunk = int(spatial_chunk)
    else:
        chunk = max(avail, 1 << 20) // (4 * C * itemsize)
        chunk = max(128, (chunk // 128) * 128)   # lane multiple of 128
    if chunk >= HW:
        chunk = HW                               # full extent is always legal
    n_chunks = pl.cdiv(HW, chunk)

    chunk_bytes = C * chunk * itemsize
    vmem_limit = int(min(max(4 * chunk_bytes + 2 * weight_bytes + (4 << 20),
                             16 << 20),
                         min(40 << 20, vmem_cap * 3 // 4)))

    # Pass 1: pooled mean (accumulated over spatial chunks) -> FC1/ReLU/FC2/tanh.
    s = pl.pallas_call(
        functools.partial(_pool_fc_kernel, inv_hw=inv_hw, hw=HW, chunk=chunk),
        out_shape=jax.ShapeDtypeStruct((B, C, 1), jnp.float32),
        grid_spec=pltpu.PrefetchScalarGridSpec(
            num_scalar_prefetch=0,
            grid=(B, n_chunks),
            in_specs=[
                pl.BlockSpec((1, C, chunk), lambda b, j: (b, 0, j)),
                pl.BlockSpec((C, Cr), lambda b, j: (0, 0)),
                pl.BlockSpec((1, Cr), lambda b, j: (0, 0)),
                pl.BlockSpec((Cr, C), lambda b, j: (0, 0)),
                pl.BlockSpec((1, C), lambda b, j: (0, 0)),
            ],
            out_specs=pl.BlockSpec((1, C, 1), lambda b, j: (b, 0, 0)),
            scratch_shapes=[pltpu.VMEM((1, C), jnp.float32)],
        ),
        compiler_params=pltpu.CompilerParams(
            dimension_semantics=("parallel", "arbitrary"),
            vmem_limit_bytes=vmem_limit),
        cost_estimate=pl.CostEstimate(
            flops=B * C * HW + 4 * B * C * Cr,
            transcendentals=B * C,
            bytes_accessed=B * per_image + weight_bytes + B * C * itemsize),
    )(x_flat, w1_t, b1_2d, w2_t, b2_2d)

    # Pass 2: channel-wise scaling, streamed over the same spatial chunks.
    out_flat = pl.pallas_call(
        _scale_kernel,
        out_shape=jax.ShapeDtypeStruct((B, C, HW), jnp.float32),
        grid_spec=pltpu.PrefetchScalarGridSpec(
            num_scalar_prefetch=0,
            grid=(B, n_chunks),
            in_specs=[
                pl.BlockSpec((1, C, chunk), lambda b, j: (b, 0, j)),
                pl.BlockSpec((1, C, 1), lambda b, j: (b, 0, 0)),
            ],
            out_specs=pl.BlockSpec((1, C, chunk), lambda b, j: (b, 0, j)),
        ),
        compiler_params=pltpu.CompilerParams(
            dimension_semantics=("parallel", "parallel"),
            vmem_limit_bytes=vmem_limit),
        cost_estimate=pl.CostEstimate(
            flops=B * C * HW,
            transcendentals=0,
            bytes_accessed=2 * B * per_image + B * C * itemsize),
    )(x_flat, s)
    return out_flat.reshape(B, C, H, W)


# ---------------------------------------------------------------------------
# Reference + self-test.
# ---------------------------------------------------------------------------
def _kaiming_uniform(key, shape):
    # torch.nn.init.kaiming_uniform_(a=0, mode='fan_in', nonlinearity='relu'):
    # bound = sqrt(2) * sqrt(3 / fan_in).
    fan_in = shape[1]
    bound = math.sqrt(2.0) * math.sqrt(3.0 / fan_in)
    return jax.random.uniform(key, shape, jnp.float32, -bound, bound)


def _reference(x, w1_t, b1, w2_t, b2):
    y = jnp.mean(x, axis=(2, 3))                     # (B, C)
    h = jnp.maximum(y @ w1_t + b1, 0.0)
    s = jnp.tanh(h @ w2_t + b2)
    return x * s[:, :, None, None]


def _make_params(key, C, reduction):
    Cr = max(1, C // reduction)
    k1, k2 = jax.random.split(key)
    w1 = _kaiming_uniform(k1, (Cr, C))               # fc1.weight (Cr, C)
    w2 = _kaiming_uniform(k2, (C, Cr))               # fc2.weight (C, Cr)
    b1 = jnp.zeros((Cr,), jnp.float32)
    b2 = jnp.zeros((C,), jnp.float32)
    return w1.T, b1, w2.T, b2                        # pre-transposed for y @ W^T


if __name__ == "__main__":
    key = jax.random.PRNGKey(0)
    k_main, k_fb, kp1, kp2 = jax.random.split(key, 4)

    # --- Test 1: main fused path -------------------------------------------
    B, C, H, W = 8, 32, 16, 16
    w1_t, b1, w2_t, b2 = _make_params(kp1, C, reduction=16)
    x = jax.random.normal(k_main, (B, C, H, W), jnp.float32)

    out = jax.block_until_ready(se_block(x, w1_t, b1, w2_t, b2))
    ref = _reference(x, w1_t, b1, w2_t, b2)
    assert out.shape == (B, C, H, W)
    assert jnp.allclose(out, ref, atol=1e-5, rtol=1e-5), "main path mismatch"

    # --- Test 2: spatially-chunked fallback (ragged last chunk) -------------
    B2, C2, H2, W2 = 2, 8, 20, 20                    # HW = 400 -> chunks of 128
    w1b_t, b1b, w2b_t, b2b = _make_params(kp2, C2, reduction=4)
    x2 = jax.random.normal(k_fb, (B2, C2, H2, W2), jnp.float32)

    out2 = jax.block_until_ready(
        se_block(x2, w1b_t, b1b, w2b_t, b2b,
                 force_spatial_tiling=True, spatial_chunk=128))
    ref2 = _reference(x2, w1b_t, b1b, w2b_t, b2b)
    assert out2.shape == (B2, C2, H2, W2)
    assert jnp.allclose(out2, ref2, atol=1e-5, rtol=1e-5), "fallback mismatch"

    print("KERNEL_OK")
</pallas_src>

<mosaic_0001>
module attributes {stable_mosaic.version = 11 : i64} {
  func.func @_se_kernel(%arg0: i32, %arg1: memref<8x32x256xf32, #tpu.memory_space<vmem>>, %arg2: memref<32x2xf32, #tpu.memory_space<vmem>>, %arg3: memref<1x2xf32, #tpu.memory_space<vmem>>, %arg4: memref<2x32xf32, #tpu.memory_space<vmem>>, %arg5: memref<1x32xf32, #tpu.memory_space<vmem>>, %arg6: memref<8x32x256xf32, #tpu.memory_space<vmem>>) attributes {dimension_semantics = [#tpu.dimension_semantics<parallel>], iteration_bounds = array<i64: 1>, scalar_prefetch = 0 : i64, scratch_operands = 0 : i64, tpu.core_type = #tpu.core_type<tc>, window_params = [{transform_indices = @transform_0, window_bounds = array<i64: 8, 32, 256>}, {pipeline_mode = #tpu.pipeline_mode<synchronous>, transform_indices = @transform_1, window_bounds = array<i64: 32, 2>}, {pipeline_mode = #tpu.pipeline_mode<synchronous>, transform_indices = @transform_2, window_bounds = array<i64: 1, 2>}, {pipeline_mode = #tpu.pipeline_mode<synchronous>, transform_indices = @transform_3, window_bounds = array<i64: 2, 32>}, {pipeline_mode = #tpu.pipeline_mode<synchronous>, transform_indices = @transform_4, window_bounds = array<i64: 1, 32>}, {transform_indices = @transform_5, window_bounds = array<i64: 8, 32, 256>}]} {
    %c0 = arith.constant 0 : index
    %c0_0 = arith.constant 0 : index
    %c0_1 = arith.constant 0 : index
    %0 = vector.load %arg1[%c0, %c0_0, %c0_1] : memref<8x32x256xf32, #tpu.memory_space<vmem>>, vector<8x32x256xf32>
    %cst = arith.constant dense<0.000000e+00> : vector<8x32xf32>
    %1 = vector.multi_reduction <add>, %0, %cst [2] : vector<8x32x256xf32> to vector<8x32xf32>
    %cst_2 = arith.constant 3.906250e-03 : f32
    %2 = vector.broadcast %cst_2 : f32 to vector<8x32xf32>
    %3 = arith.mulf %1, %2 : vector<8x32xf32>
    %c0_3 = arith.constant 0 : index
    %c0_4 = arith.constant 0 : index
    %4 = vector.load %arg2[%c0_3, %c0_4] : memref<32x2xf32, #tpu.memory_space<vmem>>, vector<32x2xf32>
    %cst_5 = arith.constant dense<0.000000e+00> : vector<8x2xf32>
    %5 = tpu.matmul %3, %4, %cst_5 {dimension_numbers = #tpu.dot_dimension_numbers<[1], [0], [0], [1], [0, 0, 1, 1], [], []>} : vector<8x32xf32>, vector<32x2xf32>, vector<8x2xf32> -> vector<8x2xf32>
    %c0_6 = arith.constant 0 : index
    %c0_7 = arith.constant 0 : index
    %6 = vector.load %arg3[%c0_6, %c0_7] : memref<1x2xf32, #tpu.memory_space<vmem>>, vector<1x2xf32>
    %7 = vector.broadcast %6 : vector<1x2xf32> to vector<8x2xf32>
    %8 = arith.addf %5, %7 : vector<8x2xf32>
    %cst_8 = arith.constant 0.000000e+00 : f32
    %9 = vector.broadcast %cst_8 : f32 to vector<8x2xf32>
    %10 = arith.maximumf %8, %9 : vector<8x2xf32>
    %c0_9 = arith.constant 0 : index
    %c0_10 = arith.constant 0 : index
    %11 = vector.load %arg4[%c0_9, %c0_10] : memref<2x32xf32, #tpu.memory_space<vmem>>, vector<2x32xf32>
    %cst_11 = arith.constant dense<0.000000e+00> : vector<8x32xf32>
    %12 = tpu.matmul %10, %11, %cst_11 {dimension_numbers = #tpu.dot_dimension_numbers<[1], [0], [0], [1], [0, 0, 1, 1], [], []>} : vector<8x2xf32>, vector<2x32xf32>, vector<8x32xf32> -> vector<8x32xf32>
    %c0_12 = arith.constant 0 : index
    %c0_13 = arith.constant 0 : index
    %13 = vector.load %arg5[%c0_12, %c0_13] : memref<1x32xf32, #tpu.memory_space<vmem>>, vector<1x32xf32>
    %14 = vector.broadcast %13 : vector<1x32xf32> to vector<8x32xf32>
    %15 = arith.addf %12, %14 : vector<8x32xf32>
    %16 = math.tanh %15 : vector<8x32xf32>
    %c0_14 = arith.constant 0 : index
    %c0_15 = arith.constant 0 : index
    %c0_16 = arith.constant 0 : index
    %17 = vector.load %arg1[%c0_14, %c0_15, %c0_16] : memref<8x32x256xf32, #tpu.memory_space<vmem>>, vector<8x32x256xf32>
    %18 = vector.shape_cast %16 : vector<8x32xf32> to vector<8x32x1xf32>
    %19 = vector.broadcast %18 : vector<8x32x1xf32> to vector<8x32x256xf32>
    %20 = arith.mulf %17, %19 : vector<8x32x256xf32>
    %c0_17 = arith.constant 0 : index
    %c0_18 = arith.constant 0 : index
    %c0_19 = arith.constant 0 : index
    %21 = vector.load %arg6[%c0_17, %c0_18, %c0_19] : memref<8x32x256xf32, #tpu.memory_space<vmem>>, vector<8x32x256xf32>
    tpu.vector_store %arg6[%c0_17, %c0_18, %c0_19], %20 {strides = array<i32>} : memref<8x32x256xf32, #tpu.memory_space<vmem>>, vector<8x32x256xf32>,
    return
  }
  func.func @transform_0(%arg0: i32) -> (i32, i32, i32) {
    %c0_i32 = arith.constant 0 : i32
    %c0_i32_0 = arith.constant 0 : i32
    %c0_i32_1 = arith.constant 0 : i32
    return %arg0, %c0_i32, %c0_i32_0 : i32, i32, i32
  }
  func.func @transform_1(%arg0: i32) -> (i32, i32) {
    %c0_i32 = arith.constant 0 : i32
    %c0_i32_0 = arith.constant 0 : i32
    %c0_i32_1 = arith.constant 0 : i32
    return %c0_i32, %c0_i32_0 : i32, i32
  }
  func.func @transform_2(%arg0: i32) -> (i32, i32) {
    %c0_i32 = arith.constant 0 : i32
    %c0_i32_0 = arith.constant 0 : i32
    %c0_i32_1 = arith.constant 0 : i32
    return %c0_i32, %c0_i32_0 : i32, i32
  }
  func.func @transform_3(%arg0: i32) -> (i32, i32) {
    %c0_i32 = arith.constant 0 : i32
    %c0_i32_0 = arith.constant 0 : i32
    %c0_i32_1 = arith.constant 0 : i32
    return %c0_i32, %c0_i32_0 : i32, i32
  }
  func.func @transform_4(%arg0: i32) -> (i32, i32) {
    %c0_i32 = arith.constant 0 : i32
    %c0_i32_0 = arith.constant 0 : i32
    %c0_i32_1 = arith.constant 0 : i32
    return %c0_i32, %c0_i32_0 : i32, i32
  }
  func.func @transform_5(%arg0: i32) -> (i32, i32, i32) {
    %c0_i32 = arith.constant 0 : i32
    %c0_i32_0 = arith.constant 0 : i32
    %c0_i32_1 = arith.constant 0 : i32
    return %arg0, %c0_i32, %c0_i32_0 : i32, i32, i32
  }
}

</mosaic_0001>

<llo_original>
// kernel: tpu_custom_call.1
$region0: #{tpu_custom_call.1}
  #allocation0 [shape = 'u32[]', space=smem, size = 0x4, offset = 0x4, fixed_abs, tag = 'smem constant byte address 0x4 - core index']
  #allocation1 [shape = 'u32[144,128]{1,0:T(1,128)}', space=vmem, size = 0x12000, scoped, tag = 'internal scratch']
  %s0 = inlined_call_operand.hbm [shape: f32[8,32,256], index: 0, kind: input, shape index: {}]
  %s1 = inlined_call_operand.vmem [shape: f32[32,2], index: 1, kind: input, shape index: {}]
  %s2 = inlined_call_operand.vmem [shape: f32[1,2], index: 2, kind: input, shape index: {}]
  %s3 = inlined_call_operand.vmem [shape: f32[2,32], index: 3, kind: input, shape index: {}]
  %s4 = inlined_call_operand.vmem [shape: f32[1,32], index: 4, kind: input, shape index: {}]
  %s5 = inlined_call_operand.hbm [shape: f32[8,32,256], index: 5, kind: output, shape index: {}]
  %s6 = sld [smem:[#allocation0]]
  $region34: #{tpu_custom_call.1} parent=0
    _
  %s8 = ssub.s32 1, %s6
  %s9 = scalar_select 0, %s8, %s6
  $region1: #{tpu_custom_call.1} parent=0
    #allocation2 [shape = 'u8[262144]{0}', space=vmem, size = 0x40000, scoped, tag = 'input window, operand 0, single buffered']
    #allocation3 [shape = 's32[1]{0}', space=sflag, size = 0x4, scoped, tag = 'scoped memory for tpu_custom_call.1']
    #allocation4 [shape = 's32[1]{0}', space=sflag, size = 0x4, scoped, tag = 'scoped memory for tpu_custom_call.1']
    #allocation5 [shape = 'u8[262144]{0}', space=vmem, size = 0x40000, scoped, tag = 'output window, operand 0, single buffered']
    %10 = vsyncpa [#allocation3], 0
    %11 = vsyncpa [#allocation4], 0
    // Predicated region
    $region2: #{tpu_custom_call.1} parent=1 // pred_check
      _
    $region3: #{tpu_custom_call.1} parent=1 // pred_check_branch
      %13 = sbr.rel (0) target = $region5
    $region4: #{tpu_custom_call.1} parent=1 // pred_region
      %s15 = ssub.s32 8192, 8192
      %16 = vsyncadd [#allocation3], %s15
      %s17 = sshll.u32 [#allocation2], 4
      %s18 = int_to_ptr.vmem [resolvable:$true] %s17
      %23 = dma.hbm_to_vmem [thread:$0]  %s0, 8192, %s18, [#allocation3], 256, 256, 16
    $region5: #{tpu_custom_call.1} parent=1 // pred_fallthru
      _
    // Predicated region
    $region6: #{tpu_custom_call.1} parent=1 // pred_check
      _
    $region7: #{tpu_custom_call.1} parent=1 // pred_check_branch
      %25 = sbr.rel (0) target = $region9
    $region8: #{tpu_custom_call.1} parent=1 // pred_region
      _
    $region9: #{tpu_custom_call.1} parent=1 // pred_fallthru
      _
    // Predicated region
    $region10: #{tpu_custom_call.1} parent=1 // pred_check
      _
    $region11: #{tpu_custom_call.1} parent=1 // pred_check_branch
      %27 = sbr.rel (0) target = $region13
    $region12: #{tpu_custom_call.1} parent=1 // pred_region
      _
    $region13: #{tpu_custom_call.1} parent=1 // pred_fallthru
      _
    // Predicated region
    $region14: #{tpu_custom_call.1} parent=1 // pred_check
      _
    $region15: #{tpu_custom_call.1} parent=1 // pred_check_branch
      %29 = sbr.rel (0) target = $region17
    $region16: #{tpu_custom_call.1} parent=1 // pred_region
      _
    $region17: #{tpu_custom_call.1} parent=1 // pred_fallthru
      _
    // Predicated region
    $region18: #{tpu_custom_call.1} parent=1 // pred_check
      _
    $region19: #{tpu_custom_call.1} parent=1 // pred_check_branch
      %31 = sbr.rel (0) target = $region21
    $region20: #{tpu_custom_call.1} parent=1 // pred_region
      _
    $region21: #{tpu_custom_call.1} parent=1 // pred_fallthru
      _
    // Predicated region
    $region22: #{tpu_custom_call.1} parent=1 // pred_check
      _
    $region23: #{tpu_custom_call.1} parent=1 // pred_check_branch
      %33 = sbr.rel (0) target = $region25
    $region24: #{tpu_custom_call.1} parent=1 // pred_region
      %34 = dma.done [#allocation3], 8192
    $region25: #{tpu_custom_call.1} parent=1 // pred_fallthru
      _
    %v35 = vld [vmem:[#allocation2] sm:$0xff]
    %v36 = vld [vmem:[#allocation2 + $0x8] sm:$0xff]
    %v37 = vld [vmem:[#allocation2 + $0x10] sm:$0xff]
    %v38 = vld [vmem:[#allocation2 + $0x18] sm:$0xff]
    %v39 = vld [vmem:[#allocation2 + $0x20] sm:$0xff]
    %v40 = vld [vmem:[#allocation2 + $0x28] sm:$0xff]
    %v41 = vld [vmem:[#allocation2 + $0x30] sm:$0xff]
    %v42 = vld [vmem:[#allocation2 + $0x38] sm:$0xff]
    %v43 = vld [vmem:[#allocation2 + $0x40] sm:$0xff]
    %v44 = vld [vmem:[#allocation2 + $0x48] sm:$0xff]
    %v45 = vld [vmem:[#allocation2 + $0x50] sm:$0xff]
    %v46 = vld [vmem:[#allocation2 + $0x58] sm:$0xff]
    %v47 = vld [vmem:[#allocation2 + $0x60] sm:$0xff]
    %v48 = vld [vmem:[#allocation2 + $0x68] sm:$0xff]
    %v49 = vld [vmem:[#allocation2 + $0x70] sm:$0xff]
    %v50 = vld [vmem:[#allocation2 + $0x78] sm:$0xff]
    %v51 = vld [vmem:[#allocation2 + $0x80] sm:$0xff]
    %v52 = vld [vmem:[#allocation2 + $0x88] sm:$0xff]
    %v53 = vld [vmem:[#allocation2 + $0x90] sm:$0xff]
    %v54 = vld [vmem:[#allocation2 + $0x98] sm:$0xff]
    %v55 = vld [vmem:[#allocation2 + $0xa0] sm:$0xff]
    %v56 = vld [vmem:[#allocation2 + $0xa8] sm:$0xff]
    %v57 = vld [vmem:[#allocation2 + $0xb0] sm:$0xff]
    %v58 = vld [vmem:[#allocation2 + $0xb8] sm:$0xff]
    %v59 = vld [vmem:[#allocation2 + $0xc0] sm:$0xff]
    %v60 = vld [vmem:[#allocation2 + $0xc8] sm:$0xff]
    %v61 = vld [vmem:[#allocation2 + $0xd0] sm:$0xff]
    %v62 = vld [vmem:[#allocation2 + $0xd8] sm:$0xff]
    %v63 = vld [vmem:[#allocation2 + $0xe0] sm:$0xff]
    %v64 = vld [vmem:[#allocation2 + $0xe8] sm:$0xff]
    %v65 = vld [vmem:[#allocation2 + $0xf0] sm:$0xff]
    %v66 = vld [vmem:[#allocation2 + $0xf8] sm:$0xff]
    %v67 = vld [vmem:[#allocation2 + $0x100] sm:$0xff]
    %v68 = vld [vmem:[#allocation2 + $0x108] sm:$0xff]
    %v69 = vld [vmem:[#allocation2 + $0x110] sm:$0xff]
    %v70 = vld [vmem:[#allocation2 + $0x118] sm:$0xff]
    %v71 = vld [vmem:[#allocation2 + $0x120] sm:$0xff]
    %v72 = vld [vmem:[#allocation2 + $0x128] sm:$0xff]
    %v73 = vld [vmem:[#allocation2 + $0x130] sm:$0xff]
    %v74 = vld [vmem:[#allocation2 + $0x138] sm:$0xff]
    %v75 = vld [vmem:[#allocation2 + $0x140] sm:$0xff]
    %v76 = vld [vmem:[#allocation2 + $0x148] sm:$0xff]
    %v77 = vld [vmem:[#allocation2 + $0x150] sm:$0xff]
    %v78 = vld [vmem:[#allocation2 + $0x158] sm:$0xff]
    %v79 = vld [vmem:[#allocation2 + $0x160] sm:$0xff]
    %v80 = vld [vmem:[#allocation2 + $0x168] sm:$0xff]
    %v81 = vld [vmem:[#allocation2 + $0x170] sm:$0xff]
    %v82 = vld [vmem:[#allocation2 + $0x178] sm:$0xff]
    %v83 = vld [vmem:[#allocation2 + $0x180] sm:$0xff]
    %v84 = vld [vmem:[#allocation2 + $0x188] sm:$0xff]
    %v85 = vld [vmem:[#allocation2 + $0x190] sm:$0xff]
    %v86 = vld [vmem:[#allocation2 + $0x198] sm:$0xff]
    %v87 = vld [vmem:[#allocation2 + $0x1a0] sm:$0xff]
    %v88 = vld [vmem:[#allocation2 + $0x1a8] sm:$0xff]
    %v89 = vld [vmem:[#allocation2 + $0x1b0] sm:$0xff]
    %v90 = vld [vmem:[#allocation2 + $0x1b8] sm:$0xff]
    %v91 = vld [vmem:[#allocation2 + $0x1c0] sm:$0xff]
    %v92 = vld [vmem:[#allocation2 + $0x1c8] sm:$0xff]
    %v93 = vld [vmem:[#allocation2 + $0x1d0] sm:$0xff]
    %v94 = vld [vmem:[#allocation2 + $0x1d8] sm:$0xff]
    %v95 = vld [vmem:[#allocation2 + $0x1e0] sm:$0xff]
    %v96 = vld [vmem:[#allocation2 + $0x1e8] sm:$0xff]
    %v97 = vld [vmem:[#allocation2 + $0x1f0] sm:$0xff]
    %v98 = vld [vmem:[#allocation2 + $0x1f8] sm:$0xff]
    %v99 = vadd.f32 %v35, %v36
    %100 = vadd.xlane.f32.xlu0 %v99
    %v101 = vpop.xlane.xlu0 %100
    %v102 = vadd.f32 %v37, %v38
    %103 = vadd.xlane.f32.xlu0 %v102
    %v104 = vpop.xlane.xlu0 %103
    %v105 = vadd.f32 %v39, %v40
    %106 = vadd.xlane.f32.xlu0 %v105
    %v107 = vpop.xlane.xlu0 %106
    %v108 = vadd.f32 %v41, %v42
    %109 = vadd.xlane.f32.xlu0 %v108
    %v110 = vpop.xlane.xlu0 %109
    %v111 = vadd.f32 %v43, %v44
    %112 = vadd.xlane.f32.xlu0 %v111
    %v113 = vpop.xlane.xlu0 %112
    %v114 = vadd.f32 %v45, %v46
    %115 = vadd.xlane.f32.xlu0 %v114
    %v116 = vpop.xlane.xlu0 %115
    %v117 = vadd.f32 %v47, %v48
    %118 = vadd.xlane.f32.xlu0 %v117
    %v119 = vpop.xlane.xlu0 %118
    %v120 = vadd.f32 %v49, %v50
    %121 = vadd.xlane.f32.xlu0 %v120
    %v122 = vpop.xlane.xlu0 %121
    %v123 = vadd.f32 %v51, %v52
    %124 = vadd.xlane.f32.xlu0 %v123
    %v125 = vpop.xlane.xlu0 %124
    %v126 = vadd.f32 %v53, %v54
    %127 = vadd.xlane.f32.xlu0 %v126
    %v128 = vpop.xlane.xlu0 %127
    %v129 = vadd.f32 %v55, %v56
    %130 = vadd.xlane.f32.xlu0 %v129
    %v131 = vpop.xlane.xlu0 %130
    %v132 = vadd.f32 %v57, %v58
    %133 = vadd.xlane.f32.xlu0 %v132
    %v134 = vpop.xlane.xlu0 %133
    %v135 = vadd.f32 %v59, %v60
    %136 = vadd.xlane.f32.xlu0 %v135
    %v137 = vpop.xlane.xlu0 %136
    %v138 = vadd.f32 %v61, %v62
    %139 = vadd.xlane.f32.xlu0 %v138
    %v140 = vpop.xlane.xlu0 %139
    %v141 = vadd.f32 %v63, %v64
    %142 = vadd.xlane.f32.xlu0 %v141
    %v143 = vpop.xlane.xlu0 %142
    %v144 = vadd.f32 %v65, %v66
    %145 = vadd.xlane.f32.xlu0 %v144
    %v146 = vpop.xlane.xlu0 %145
    %v147 = vadd.f32 %v67, %v68
    %148 = vadd.xlane.f32.xlu0 %v147
    %v149 = vpop.xlane.xlu0 %148
    %v150 = vadd.f32 %v69, %v70
    %151 = vadd.xlane.f32.xlu0 %v150
    %v152 = vpop.xlane.xlu0 %151
    %v153 = vadd.f32 %v71, %v72
    %154 = vadd.xlane.f32.xlu0 %v153
    %v155 = vpop.xlane.xlu0 %154
    %v156 = vadd.f32 %v73, %v74
    %157 = vadd.xlane.f32.xlu0 %v156
    %v158 = vpop.xlane.xlu0 %157
    %v159 = vadd.f32 %v75, %v76
    %160 = vadd.xlane.f32.xlu0 %v159
    %v161 = vpop.xlane.xlu0 %160
    %v162 = vadd.f32 %v77, %v78
    %163 = vadd.xlane.f32.xlu0 %v162
    %v164 = vpop.xlane.xlu0 %163
    %v165 = vadd.f32 %v79, %v80
    %166 = vadd.xlane.f32.xlu0 %v165
    %v167 = vpop.xlane.xlu0 %166
    %v168 = vadd.f32 %v81, %v82
    %169 = vadd.xlane.f32.xlu0 %v168
    %v170 = vpop.xlane.xlu0 %169
    %v171 = vadd.f32 %v83, %v84
    %172 = vadd.xlane.f32.xlu0 %v171
    %v173 = vpop.xlane.xlu0 %172
    %v174 = vadd.f32 %v85, %v86
    %175 = vadd.xlane.f32.xlu0 %v174
    %v176 = vpop.xlane.xlu0 %175
    %v177 = vadd.f32 %v87, %v88
    %178 = vadd.xlane.f32.xlu0 %v177
    %v179 = vpop.xlane.xlu0 %178
    %v180 = vadd.f32 %v89, %v90
    %181 = vadd.xlane.f32.xlu0 %v180
    %v182 = vpop.xlane.xlu0 %181
    %v183 = vadd.f32 %v91, %v92
    %184 = vadd.xlane.f32.xlu0 %v183
    %v185 = vpop.xlane.xlu0 %184
    %v186 = vadd.f32 %v93, %v94
    %187 = vadd.xlane.f32.xlu0 %v186
    %v188 = vpop.xlane.xlu0 %187
    %v189 = vadd.f32 %v95, %v96
    %190 = vadd.xlane.f32.xlu0 %v189
    %v191 = vpop.xlane.xlu0 %190
    %v192 = vadd.f32 %v97, %v98
    %193 = vadd.xlane.f32.xlu0 %v192
    %v194 = vpop.xlane.xlu0 %193
    %v195 = vmul.f32 %v101, 0.00390625
    %v196 = vmul.f32 %v104, 0.00390625
    %v197 = vmul.f32 %v107, 0.00390625
    %v198 = vmul.f32 %v110, 0.00390625
    %v199 = vmul.f32 %v113, 0.00390625
    %v200 = vmul.f32 %v116, 0.00390625
    %v201 = vmul.f32 %v119, 0.00390625
    %v202 = vmul.f32 %v122, 0.00390625
    %v203 = vmul.f32 %v125, 0.00390625
    %v204 = vmul.f32 %v128, 0.00390625
    %v205 = vmul.f32 %v131, 0.00390625
    %v206 = vmul.f32 %v134, 0.00390625
    %v207 = vmul.f32 %v137, 0.00390625
    %v208 = vmul.f32 %v140, 0.00390625
    %v209 = vmul.f32 %v143, 0.00390625
    %v210 = vmul.f32 %v146, 0.00390625
    %v211 = vmul.f32 %v149, 0.00390625
    %v212 = vmul.f32 %v152, 0.00390625
    %v213 = vmul.f32 %v155, 0.00390625
    %v214 = vmul.f32 %v158, 0.00390625
    %v215 = vmul.f32 %v161, 0.00390625
    %v216 = vmul.f32 %v164, 0.00390625
    %v217 = vmul.f32 %v167, 0.00390625
    %v218 = vmul.f32 %v170, 0.00390625
    %v219 = vmul.f32 %v173, 0.00390625
    %v220 = vmul.f32 %v176, 0.00390625
    %v221 = vmul.f32 %v179, 0.00390625
    %v222 = vmul.f32 %v182, 0.00390625
    %v223 = vmul.f32 %v185, 0.00390625
    %v224 = vmul.f32 %v188, 0.00390625
    %v225 = vmul.f32 %v191, 0.00390625
    %v226 = vmul.f32 %v194, 0.00390625
    %v227 = vld [vmem:[%s1] sm:$0xff]
    %v228 = vld [vmem:[%s1 + $0x8] sm:$0xff]
    %v229 = vld [vmem:[%s1 + $0x10] sm:$0xff]
    %v230 = vld [vmem:[%s1 + $0x18] sm:$0xff]
    %v231 = vld [vmem:[%s2] sm:$0x1]
    %v233 = vlaneseq
    %v234 = vshrl.u32 %v233, 7
    %v235 = vsub.s32 0, %v234
    %v236 = vrot.slane %v231, %v235
    %v270 = vlaneseq
    %v271 = vand.u32 %v270, 127
    %v272 = vlaneseq
    %v273 = vshrl.u32 %v272, 7
    %v274 = vsub.s32 %v271, %v273
    %v275 = vrot.slane %v195, %v274
    %v276 = vadd.s32 %v271, 4294967288
    %v277 = vlaneseq
    %v278 = vshrl.u32 %v277, 7
    %v279 = vsub.s32 %v276, %v278
    %v280 = vrot.slane %v196, %v279
    %vm281 = vcmask 130112
    %v282 = vsel %vm281, %v280, %v275
    %v283 = vadd.s32 %v271, 4294967280
    %v284 = vlaneseq
    %v285 = vshrl.u32 %v284, 7
    %v286 = vsub.s32 %v283, %v285
    %v287 = vrot.slane %v197, %v286
    %vm288 = vcmask 195712
    %v289 = vsel %vm288, %v287, %v282
    %v290 = vadd.s32 %v271, 4294967272
    %v291 = vlaneseq
    %v292 = vshrl.u32 %v291, 7
    %v293 = vsub.s32 %v290, %v292
    %v294 = vrot.slane %v198, %v293
    %vm295 = vcmask 261312
    %v296 = vsel %vm295, %v294, %v289
    %v297 = vlaneseq
    %v298 = vshrl.u32 %v297, 7
    %v299 = vsub.s32 %v271, %v298
    %v300 = vrot.slane %v199, %v299
    %v301 = vlaneseq
    %v302 = vshrl.u32 %v301, 7
    %v303 = vsub.s32 %v276, %v302
    %v304 = vrot.slane %v200, %v303
    %v305 = vsel %vm281, %v304, %v300
    %v306 = vlaneseq
    %v307 = vshrl.u32 %v306, 7
    %v308 = vsub.s32 %v283, %v307
    %v309 = vrot.slane %v201, %v308
    %v310 = vsel %vm288, %v309, %v305
    %v311 = vlaneseq
    %v312 = vshrl.u32 %v311, 7
    %v313 = vsub.s32 %v290, %v312
    %v314 = vrot.slane %v202, %v313
    %v315 = vsel %vm295, %v314, %v310
    %v316 = vlaneseq
    %v317 = vshrl.u32 %v316, 7
    %v318 = vsub.s32 %v271, %v317
    %v319 = vrot.slane %v203, %v318
    %v320 = vlaneseq
    %v321 = vshrl.u32 %v320, 7
    %v322 = vsub.s32 %v276, %v321
    %v323 = vrot.slane %v204, %v322
    %v324 = vsel %vm281, %v323, %v319
    %v325 = vlaneseq
    %v326 = vshrl.u32 %v325, 7
    %v327 = vsub.s32 %v283, %v326
    %v328 = vrot.slane %v205, %v327
    %v329 = vsel %vm288, %v328, %v324
    %v330 = vlaneseq
    %v331 = vshrl.u32 %v330, 7
    %v332 = vsub.s32 %v290, %v331
    %v333 = vrot.slane %v206, %v332
    %v334 = vsel %vm295, %v333, %v329
    %v335 = vlaneseq
    %v336 = vshrl.u32 %v335, 7
    %v337 = vsub.s32 %v271, %v336
    %v338 = vrot.slane %v207, %v337
    %v339 = vlaneseq
    %v340 = vshrl.u32 %v339, 7
    %v341 = vsub.s32 %v276, %v340
    %v342 = vrot.slane %v208, %v341
    %v343 = vsel %vm281, %v342, %v338
    %v344 = vlaneseq
    %v345 = vshrl.u32 %v344, 7
    %v346 = vsub.s32 %v283, %v345
    %v347 = vrot.slane %v209, %v346
    %v348 = vsel %vm288, %v347, %v343
    %v349 = vlaneseq
    %v350 = vshrl.u32 %v349, 7
    %v351 = vsub.s32 %v290, %v350
    %v352 = vrot.slane %v210, %v351
    %v353 = vsel %vm295, %v352, %v348
    %v354 = vlaneseq
    %v355 = vshrl.u32 %v354, 7
    %v356 = vsub.s32 %v271, %v355
    %v357 = vrot.slane %v211, %v356
    %v358 = vlaneseq
    %v359 = vshrl.u32 %v358, 7
    %v360 = vsub.s32 %v276, %v359
    %v361 = vrot.slane %v212, %v360
    %v362 = vsel %vm281, %v361, %v357
    %v363 = vlaneseq
    %v364 = vshrl.u32 %v363, 7
    %v365 = vsub.s32 %v283, %v364
    %v366 = vrot.slane %v213, %v365
    %v367 = vsel %vm288, %v366, %v362
    %v368 = vlaneseq
    %v369 = vshrl.u32 %v368, 7
    %v370 = vsub.s32 %v290, %v369
    %v371 = vrot.slane %v214, %v370
    %v372 = vsel %vm295, %v371, %v367
    %v373 = vlaneseq
    %v374 = vshrl.u32 %v373, 7
    %v375 = vsub.s32 %v271, %v374
    %v376 = vrot.slane %v215, %v375
    %v377 = vlaneseq
    %v378 = vshrl.u32 %v377, 7
    %v379 = vsub.s32 %v276, %v378
    %v380 = vrot.slane %v216, %v379
    %v381 = vsel %vm281, %v380, %v376
    %v382 = vlaneseq
    %v383 = vshrl.u32 %v382, 7
    %v384 = vsub.s32 %v283, %v383
    %v385 = vrot.slane %v217, %v384
    %v386 = vsel %vm288, %v385, %v381
    %v387 = vlaneseq
    %v388 = vshrl.u32 %v387, 7
    %v389 = vsub.s32 %v290, %v388
    %v390 = vrot.slane %v218, %v389
    %v391 = vsel %vm295, %v390, %v386
    %v392 = vlaneseq
    %v393 = vshrl.u32 %v392, 7
    %v394 = vsub.s32 %v271, %v393
    %v395 = vrot.slane %v219, %v394
    %v396 = vlaneseq
    %v397 = vshrl.u32 %v396, 7
    %v398 = vsub.s32 %v276, %v397
    %v399 = vrot.slane %v220, %v398
    %v400 = vsel %vm281, %v399, %v395
    %v401 = vlaneseq
    %v402 = vshrl.u32 %v401, 7
    %v403 = vsub.s32 %v283, %v402
    %v404 = vrot.slane %v221, %v403
    %v405 = vsel %vm288, %v404, %v400
    %v406 = vlaneseq
    %v407 = vshrl.u32 %v406, 7
    %v408 = vsub.s32 %v290, %v407
    %v409 = vrot.slane %v222, %v408
    %v410 = vsel %vm295, %v409, %v405
    %v411 = vlaneseq
    %v412 = vshrl.u32 %v411, 7
    %v413 = vsub.s32 %v271, %v412
    %v414 = vrot.slane %v223, %v413
    %v415 = vlaneseq
    %v416 = vshrl.u32 %v415, 7
    %v417 = vsub.s32 %v276, %v416
    %v418 = vrot.slane %v224, %v417
    %v419 = vsel %vm281, %v418, %v414
    %v420 = vlaneseq
    %v421 = vshrl.u32 %v420, 7
    %v422 = vsub.s32 %v283, %v421
    %v423 = vrot.slane %v225, %v422
    %v424 = vsel %vm288, %v423, %v419
    %v425 = vlaneseq
    %v426 = vshrl.u32 %v425, 7
    %v427 = vsub.s32 %v290, %v426
    %v428 = vrot.slane %v226, %v427
    %v429 = vsel %vm295, %v428, %v424
    %vm430 = vcmask 1041409
    %v431 = vsel %vm430, %v315, %v296
    %vm432 = vcmask 1042434
    %v433 = vsel %vm432, %v334, %v431
    %vm434 = vcmask 1043459
    %v435 = vsel %vm434, %v353, %v433
    %vm436 = vcmask 1044484
    %v437 = vsel %vm436, %v372, %v435
    %vm438 = vcmask 1045509
    %v439 = vsel %vm438, %v391, %v437
    %vm440 = vcmask 1046534
    %v441 = vsel %vm440, %v410, %v439
    %vm442 = vcmask 1047559
    %v443 = vsel %vm442, %v429, %v441
    %vm444 = vcmask 261120
    %v445 = vsel %vm444, %v443, 0
    %447 = vmatprep.subr.mxu0 0.0
    %448 = vmatpush1.msra.mxu0 %v227
    %449 = vmatprep.subr.mxu0 0.0
    %450 = vmatpush1.msra.mxu0 %v228
    %451 = vmatprep.subr.mxu0 0.0
    %452 = vmatpush1.msra.mxu0 %v229
    %453 = vmatprep.subr.mxu0 0.0
    %454 = vmatpush1.msra.mxu0 %v230
    %455 = vmatprep.subr.mxu0 0.0
    %456 = vmatpush1.msra.mxu0 0.0
    %457 = vmatprep.subr.mxu0 0.0
    %458 = vmatpush1.msra.mxu0 0.0
    %459 = vmatprep.subr.mxu0 0.0
    %460 = vmatpush1.msra.mxu0 0.0
    %461 = vmatprep.subr.mxu0 0.0
    %462 = vmatpush1.msra.mxu0 0.0
    %463 = vmatprep.subr.mxu0 0.0
    %464 = vmatpush1.msra.mxu0 0.0
    %465 = vmatprep.subr.mxu0 0.0
    %466 = vmatpush1.msra.mxu0 0.0
    %467 = vmatprep.subr.mxu0 0.0
    %468 = vmatpush1.msra.mxu0 0.0
    %469 = vmatprep.subr.mxu0 0.0
    %470 = vmatpush1.msra.mxu0 0.0
    %471 = vmatprep.subr.mxu0 0.0
    %472 = vmatpush1.msra.mxu0 0.0
    %473 = vmatprep.subr.mxu0 0.0
    %474 = vmatpush1.msra.mxu0 0.0
    %475 = vmatprep.subr.mxu0 0.0
    %476 = vmatpush1.msra.mxu0 0.0
    %477 = vmatprep.subr.mxu0 0.0
    %478 = vmatpush1.msra.mxu0 0.0
    %479 = vmatprep.subr.mxu0 0.0
    %480 = vmatpush1.msra.mxu0 0.0
    %481 = vmatprep.subr.mxu0 0.0
    %482 = vmatpush1.msra.mxu0 0.0
    %483 = vmatprep.subr.mxu0 0.0
    %484 = vmatpush1.msra.mxu0 0.0
    %485 = vmatprep.subr.mxu0 0.0
    %486 = vmatpush1.msra.mxu0 0.0
    %487 = vmatprep.subr.mxu0 0.0
    %488 = vmatpush1.msra.mxu0 0.0
    %489 = vmatprep.subr.mxu0 0.0
    %490 = vmatpush1.msra.mxu0 0.0
    %491 = vmatprep.subr.mxu0 0.0
    %492 = vmatpush1.msra.mxu0 0.0
    %493 = vmatprep.subr.mxu0 0.0
    %494 = vmatpush1.msra.mxu0 0.0
    %495 = vmatprep.subr.mxu0 0.0
    %496 = vmatpush1.msra.mxu0 0.0
    %497 = vmatprep.subr.mxu0 0.0
    %498 = vmatpush1.msra.mxu0 0.0
    %499 = vmatprep.subr.mxu0 0.0
    %500 = vmatpush1.msra.mxu0 0.0
    %501 = vmatprep.subr.mxu0 0.0
    %502 = vmatpush1.msra.mxu0 0.0
    %503 = vmatprep.subr.mxu0 0.0
    %504 = vmatpush1.msra.mxu0 0.0
    %505 = vmatprep.subr.mxu0 0.0
    %506 = vmatpush1.msra.mxu0 0.0
    %507 = vmatprep.subr.mxu0 0.0
    %508 = vmatpush1.msra.mxu0 0.0
    %509 = vmatprep.subr.mxu0 0.0
    %510 = vmatpush1.msra.mxu0 0.0
    %511 = vmatprep.mubr.f32.mxu0 0.0
    %512 = vmatmul.mubr.f32.gmra.mrb[0].mxu0 %v445
    %v513 = vpop.f32.mrb[0].mxu0
    %v514 = vadd.f32 %v236, %v513
    %v515 = vpop.f32.mrb[0].mxu0
    %516 = vdwg.mxu0
    %v517 = vmax.f32 %v514, 0.0
    %v518 = vld [vmem:[%s3] sm:$0x3]
    %v519 = vld [vmem:[%s4] sm:$0x1]
    %v521 = vlaneseq
    %v522 = vshrl.u32 %v521, 7
    %v523 = vsub.s32 0, %v522
    %v524 = vrot.slane %v519, %v523
    %vm526 = vcmask 15360
    %v528 = vsel %vm526, %v517, 0
    %vm530 = vcmask 1041408
    %v532 = vsel %vm530, %v518, 0
    %534 = vmatprep.subr.mxu0 0.0
    %535 = vmatpush1.msra.mxu0 %v532
    %536 = vmatprep.subr.mxu0 0.0
    %537 = vmatpush1.msra.mxu0 0.0
    %538 = vmatprep.subr.mxu0 0.0
    %539 = vmatpush1.msra.mxu0 0.0
    %540 = vmatprep.subr.mxu0 0.0
    %541 = vmatpush1.msra.mxu0 0.0
    %542 = vmatprep.subr.mxu0 0.0
    %543 = vmatpush1.msra.mxu0 0.0
    %544 = vmatprep.subr.mxu0 0.0
    %545 = vmatpush1.msra.mxu0 0.0
    %546 = vmatprep.subr.mxu0 0.0
    %547 = vmatpush1.msra.mxu0 0.0
    %548 = vmatprep.subr.mxu0 0.0
    %549 = vmatpush1.msra.mxu0 0.0
    %550 = vmatprep.subr.mxu0 0.0
    %551 = vmatpush1.msra.mxu0 0.0
    %552 = vmatprep.subr.mxu0 0.0
    %553 = vmatpush1.msra.mxu0 0.0
    %554 = vmatprep.subr.mxu0 0.0
    %555 = vmatpush1.msra.mxu0 0.0
    %556 = vmatprep.subr.mxu0 0.0
    %557 = vmatpush1.msra.mxu0 0.0
    %558 = vmatprep.subr.mxu0 0.0
    %559 = vmatpush1.msra.mxu0 0.0
    %560 = vmatprep.subr.mxu0 0.0
    %561 = vmatpush1.msra.mxu0 0.0
    %562 = vmatprep.subr.mxu0 0.0
    %563 = vmatpush1.msra.mxu0 0.0
    %564 = vmatprep.subr.mxu0 0.0
    %565 = vmatpush1.msra.mxu0 0.0
    %566 = vmatprep.subr.mxu0 0.0
    %567 = vmatpush1.msra.mxu0 0.0
    %568 = vmatprep.subr.mxu0 0.0
    %569 = vmatpush1.msra.mxu0 0.0
    %570 = vmatprep.subr.mxu0 0.0
    %571 = vmatpush1.msra.mxu0 0.0
    %572 = vmatprep.subr.mxu0 0.0
    %573 = vmatpush1.msra.mxu0 0.0
    %574 = vmatprep.subr.mxu0 0.0
    %575 = vmatpush1.msra.mxu0 0.0
    %576 = vmatprep.subr.mxu0 0.0
    %577 = vmatpush1.msra.mxu0 0.0
    %578 = vmatprep.subr.mxu0 0.0
    %579 = vmatpush1.msra.mxu0 0.0
    %580 = vmatprep.subr.mxu0 0.0
    %581 = vmatpush1.msra.mxu0 0.0
    %582 = vmatprep.subr.mxu0 0.0
    %583 = vmatpush1.msra.mxu0 0.0
    %584 = vmatprep.subr.mxu0 0.0
    %585 = vmatpush1.msra.mxu0 0.0
    %586 = vmatprep.subr.mxu0 0.0
    %587 = vmatpush1.msra.mxu0 0.0
    %588 = vmatprep.subr.mxu0 0.0
    %589 = vmatpush1.msra.mxu0 0.0
    %590 = vmatprep.subr.mxu0 0.0
    %591 = vmatpush1.msra.mxu0 0.0
    %592 = vmatprep.subr.mxu0 0.0
    %593 = vmatpush1.msra.mxu0 0.0
    %594 = vmatprep.subr.mxu0 0.0
    %595 = vmatpush1.msra.mxu0 0.0
    %596 = vmatprep.subr.mxu0 0.0
    %597 = vmatpush1.msra.mxu0 0.0
    %598 = vmatprep.mubr.f32.mxu0 0.0
    %599 = vmatmul.mubr.f32.gmra.mrb[0].mxu0 %v528
    %v600 = vpop.f32.mrb[0].mxu0
    %v601 = vadd.f32 %v524, %v600
    %v602 = vpop.f32.mrb[0].mxu0
    %603 = vdwg.mxu0
    %v604 = vtanh.pop %v601
    %v605 = vlaneseq
    %v606 = vshrl.u32 %v605, 7
    %v607 = vsub.s32 0, %v606
    %v608 = vrot.slane %v604, %v607
    %610 = vbcast.lane.b32.xlu0 %v608, 256
    %v611 = vpop.permute.xlu0 %610
    %s613 = sor.u32 256, 8
    %614 = vbcast.lane.b32.xlu0 %v608, %s613
    %v615 = vpop.permute.xlu0 %614
    %s617 = sor.u32 256, 16
    %618 = vbcast.lane.b32.xlu0 %v608, %s617
    %v619 = vpop.permute.xlu0 %618
    %s621 = sor.u32 256, 24
    %622 = vbcast.lane.b32.xlu0 %v608, %s621
    %v623 = vpop.permute.xlu0 %622
    %v624 = vlaneseq
    %v625 = vshrl.u32 %v624, 7
    %v626 = vsub.s32 1, %v625
    %v627 = vrot.slane %v604, %v626
    %629 = vbcast.lane.b32.xlu0 %v627, 256
    %v630 = vpop.permute.xlu0 %629
    %s632 = sor.u32 256, 8
    %633 = vbcast.lane.b32.xlu0 %v627, %s632
    %v634 = vpop.permute.xlu0 %633
    %s636 = sor.u32 256, 16
    %637 = vbcast.lane.b32.xlu0 %v627, %s636
    %v638 = vpop.permute.xlu0 %637
    %s640 = sor.u32 256, 24
    %641 = vbcast.lane.b32.xlu0 %v627, %s640
    %v642 = vpop.permute.xlu0 %641
    %v643 = vlaneseq
    %v644 = vshrl.u32 %v643, 7
    %v645 = vsub.s32 2, %v644
    %v646 = vrot.slane %v604, %v645
    %648 = vbcast.lane.b32.xlu0 %v646, 256
    %v649 = vpop.permute.xlu0 %648
    %s651 = sor.u32 256, 8
    %652 = vbcast.lane.b32.xlu0 %v646, %s651
    %v653 = vpop.permute.xlu0 %652
    %s655 = sor.u32 256, 16
    %656 = vbcast.lane.b32.xlu0 %v646, %s655
    %v657 = vpop.permute.xlu0 %656
    %s659 = sor.u32 256, 24
    %660 = vbcast.lane.b32.xlu0 %v646, %s659
    %v661 = vpop.permute.xlu0 %660
    %v662 = vlaneseq
    %v663 = vshrl.u32 %v662, 7
    %v664 = vsub.s32 3, %v663
    %v665 = vrot.slane %v604, %v664
    %667 = vbcast.lane.b32.xlu0 %v665, 256
    %v668 = vpop.permute.xlu0 %667
    %s670 = sor.u32 256, 8
    %671 = vbcast.lane.b32.xlu0 %v665, %s670
    %v672 = vpop.permute.xlu0 %671
    %s674 = sor.u32 256, 16
    %675 = vbcast.lane.b32.xlu0 %v665, %s674
    %v676 = vpop.permute.xlu0 %675
    %s678 = sor.u32 256, 24
    %679 = vbcast.lane.b32.xlu0 %v665, %s678
    %v680 = vpop.permute.xlu0 %679
    %v681 = vlaneseq
    %v682 = vshrl.u32 %v681, 7
    %v683 = vsub.s32 4, %v682
    %v684 = vrot.slane %v604, %v683
    %686 = vbcast.lane.b32.xlu0 %v684, 256
    %v687 = vpop.permute.xlu0 %686
    %s689 = sor.u32 256, 8
    %690 = vbcast.lane.b32.xlu0 %v684, %s689
    %v691 = vpop.permute.xlu0 %690
    %s693 = sor.u32 256, 16
    %694 = vbcast.lane.b32.xlu0 %v684, %s693
    %v695 = vpop.permute.xlu0 %694
    %s697 = sor.u32 256, 24
    %698 = vbcast.lane.b32.xlu0 %v684, %s697
    %v699 = vpop.permute.xlu0 %698
    %v700 = vlaneseq
    %v701 = vshrl.u32 %v700, 7
    %v702 = vsub.s32 5, %v701
    %v703 = vrot.slane %v604, %v702
    %705 = vbcast.lane.b32.xlu0 %v703, 256
    %v706 = vpop.permute.xlu0 %705
    %s708 = sor.u32 256, 8
    %709 = vbcast.lane.b32.xlu0 %v703, %s708
    %v710 = vpop.permute.xlu0 %709
    %s712 = sor.u32 256, 16
    %713 = vbcast.lane.b32.xlu0 %v703, %s712
    %v714 = vpop.permute.xlu0 %713
    %s716 = sor.u32 256, 24
    %717 = vbcast.lane.b32.xlu0 %v703, %s716
    %v718 = vpop.permute.xlu0 %717
    %v719 = vlaneseq
    %v720 = vshrl.u32 %v719, 7
    %v721 = vsub.s32 6, %v720
    %v722 = vrot.slane %v604, %v721
    %724 = vbcast.lane.b32.xlu0 %v722, 256
    %v725 = vpop.permute.xlu0 %724
    %s727 = sor.u32 256, 8
    %728 = vbcast.lane.b32.xlu0 %v722, %s727
    %v729 = vpop.permute.xlu0 %728
    %s731 = sor.u32 256, 16
    %732 = vbcast.lane.b32.xlu0 %v722, %s731
    %v733 = vpop.permute.xlu0 %732
    %s735 = sor.u32 256, 24
    %736 = vbcast.lane.b32.xlu0 %v722, %s735
    %v737 = vpop.permute.xlu0 %736
    %v738 = vlaneseq
    %v739 = vshrl.u32 %v738, 7
    %v740 = vsub.s32 7, %v739
    %v741 = vrot.slane %v604, %v740
    %743 = vbcast.lane.b32.xlu0 %v741, 256
    %v744 = vpop.permute.xlu0 %743
    %s746 = sor.u32 256, 8
    %747 = vbcast.lane.b32.xlu0 %v741, %s746
    %v748 = vpop.permute.xlu0 %747
    %s750 = sor.u32 256, 16
    %751 = vbcast.lane.b32.xlu0 %v741, %s750
    %v752 = vpop.permute.xlu0 %751
    %s754 = sor.u32 256, 24
    %755 = vbcast.lane.b32.xlu0 %v741, %s754
    %v756 = vpop.permute.xlu0 %755
    %v757 = vmul.f32 %v35, %v611
    %v758 = vmul.f32 %v36, %v611
    %v759 = vmul.f32 %v37, %v615
    %v760 = vmul.f32 %v38, %v615
    %v761 = vmul.f32 %v39, %v619
    %v762 = vmul.f32 %v40, %v619
    %v763 = vmul.f32 %v41, %v623
    %v764 = vmul.f32 %v42, %v623
    %v765 = vmul.f32 %v43, %v630
    %v766 = vmul.f32 %v44, %v630
    %v767 = vmul.f32 %v45, %v634
    %v768 = vmul.f32 %v46, %v634
    %v769 = vmul.f32 %v47, %v638
    %v770 = vmul.f32 %v48, %v638
    %v771 = vmul.f32 %v49, %v642
    %v772 = vmul.f32 %v50, %v642
    %v773 = vmul.f32 %v51, %v649
    %v774 = vmul.f32 %v52, %v649
    %v775 = vmul.f32 %v53, %v653
    %v776 = vmul.f32 %v54, %v653
    %v777 = vmul.f32 %v55, %v657
    %v778 = vmul.f32 %v56, %v657
    %v779 = vmul.f32 %v57, %v661
    %v780 = vmul.f32 %v58, %v661
    %v781 = vmul.f32 %v59, %v668
    %v782 = vmul.f32 %v60, %v668
    %v783 = vmul.f32 %v61, %v672
    %v784 = vmul.f32 %v62, %v672
    %v785 = vmul.f32 %v63, %v676
    %v786 = vmul.f32 %v64, %v676
    %v787 = vmul.f32 %v65, %v680
    %v788 = vmul.f32 %v66, %v680
    %v789 = vmul.f32 %v67, %v687
    %v790 = vmul.f32 %v68, %v687
    %v791 = vmul.f32 %v69, %v691
    %v792 = vmul.f32 %v70, %v691
    %v793 = vmul.f32 %v71, %v695
    %v794 = vmul.f32 %v72, %v695
    %v795 = vmul.f32 %v73, %v699
    %v796 = vmul.f32 %v74, %v699
    %v797 = vmul.f32 %v75, %v706
    %v798 = vmul.f32 %v76, %v706
    %v799 = vmul.f32 %v77, %v710
    %v800 = vmul.f32 %v78, %v710
    %v801 = vmul.f32 %v79, %v714
    %v802 = vmul.f32 %v80, %v714
    %v803 = vmul.f32 %v81, %v718
    %v804 = vmul.f32 %v82, %v718
    %v805 = vmul.f32 %v83, %v725
    %v806 = vmul.f32 %v84, %v725
    %v807 = vmul.f32 %v85, %v729
    %v808 = vmul.f32 %v86, %v729
    %v809 = vmul.f32 %v87, %v733
    %v810 = vmul.f32 %v88, %v733
    %v811 = vmul.f32 %v89, %v737
    %v812 = vmul.f32 %v90, %v737
    %v813 = vmul.f32 %v91, %v744
    %v814 = vmul.f32 %v92, %v744
    %v815 = vmul.f32 %v93, %v748
    %v816 = vmul.f32 %v94, %v748
    %v817 = vmul.f32 %v95, %v752
    %v818 = vmul.f32 %v96, %v752
    %v819 = vmul.f32 %v97, %v756
    %v820 = vmul.f32 %v98, %v756
    %821 = vst [vmem:[#allocation5] sm:$0xff] %v757
    %822 = vst [vmem:[#allocation5 + $0x8] sm:$0xff] %v758
    %823 = vst [vmem:[#allocation5 + $0x10] sm:$0xff] %v759
    %824 = vst [vmem:[#allocation5 + $0x18] sm:$0xff] %v760
    %825 = vst [vmem:[#allocation5 + $0x20] sm:$0xff] %v761
    %826 = vst [vmem:[#allocation5 + $0x28] sm:$0xff] %v762
    %827 = vst [vmem:[#allocation5 + $0x30] sm:$0xff] %v763
    %828 = vst [vmem:[#allocation5 + $0x38] sm:$0xff] %v764
    %829 = vst [vmem:[#allocation5 + $0x40] sm:$0xff] %v765
    %830 = vst [vmem:[#allocation5 + $0x48] sm:$0xff] %v766
    %831 = vst [vmem:[#allocation5 + $0x50] sm:$0xff] %v767
    %832 = vst [vmem:[#allocation5 + $0x58] sm:$0xff] %v768
    %833 = vst [vmem:[#allocation5 + $0x60] sm:$0xff] %v769
    %834 = vst [vmem:[#allocation5 + $0x68] sm:$0xff] %v770
    %835 = vst [vmem:[#allocation5 + $0x70] sm:$0xff] %v771
    %836 = vst [vmem:[#allocation5 + $0x78] sm:$0xff] %v772
    %837 = vst [vmem:[#allocation5 + $0x80] sm:$0xff] %v773
    %838 = vst [vmem:[#allocation5 + $0x88] sm:$0xff] %v774
    %839 = vst [vmem:[#allocation5 + $0x90] sm:$0xff] %v775
    %840 = vst [vmem:[#allocation5 + $0x98] sm:$0xff] %v776
    %841 = vst [vmem:[#allocation5 + $0xa0] sm:$0xff] %v777
    %842 = vst [vmem:[#allocation5 + $0xa8] sm:$0xff] %v778
    %843 = vst [vmem:[#allocation5 + $0xb0] sm:$0xff] %v779
    %844 = vst [vmem:[#allocation5 + $0xb8] sm:$0xff] %v780
    %845 = vst [vmem:[#allocation5 + $0xc0] sm:$0xff] %v781
    %846 = vst [vmem:[#allocation5 + $0xc8] sm:$0xff] %v782
    %847 = vst [vmem:[#allocation5 + $0xd0] sm:$0xff] %v783
    %848 = vst [vmem:[#allocation5 + $0xd8] sm:$0xff] %v784
    %849 = vst [vmem:[#allocation5 + $0xe0] sm:$0xff] %v785
    %850 = vst [vmem:[#allocation5 + $0xe8] sm:$0xff] %v786
    %851 = vst [vmem:[#allocation5 + $0xf0] sm:$0xff] %v787
    %852 = vst [vmem:[#allocation5 + $0xf8] sm:$0xff] %v788
    %853 = vst [vmem:[#allocation5 + $0x100] sm:$0xff] %v789
    %854 = vst [vmem:[#allocation5 + $0x108] sm:$0xff] %v790
    %855 = vst [vmem:[#allocation5 + $0x110] sm:$0xff] %v791
    %856 = vst [vmem:[#allocation5 + $0x118] sm:$0xff] %v792
    %857 = vst [vmem:[#allocation5 + $0x120] sm:$0xff] %v793
    %858 = vst [vmem:[#allocation5 + $0x128] sm:$0xff] %v794
    %859 = vst [vmem:[#allocation5 + $0x130] sm:$0xff] %v795
    %860 = vst [vmem:[#allocation5 + $0x138] sm:$0xff] %v796
    %861 = vst [vmem:[#allocation5 + $0x140] sm:$0xff] %v797
    %862 = vst [vmem:[#allocation5 + $0x148] sm:$0xff] %v798
    %863 = vst [vmem:[#allocation5 + $0x150] sm:$0xff] %v799
    %864 = vst [vmem:[#allocation5 + $0x158] sm:$0xff] %v800
    %865 = vst [vmem:[#allocation5 + $0x160] sm:$0xff] %v801
    %866 = vst [vmem:[#allocation5 + $0x168] sm:$0xff] %v802
    %867 = vst [vmem:[#allocation5 + $0x170] sm:$0xff] %v803
    %868 = vst [vmem:[#allocation5 + $0x178] sm:$0xff] %v804
    %869 = vst [vmem:[#allocation5 + $0x180] sm:$0xff] %v805
    %870 = vst [vmem:[#allocation5 + $0x188] sm:$0xff] %v806
    %871 = vst [vmem:[#allocation5 + $0x190] sm:$0xff] %v807
    %872 = vst [vmem:[#allocation5 + $0x198] sm:$0xff] %v808
    %873 = vst [vmem:[#allocation5 + $0x1a0] sm:$0xff] %v809
    %874 = vst [vmem:[#allocation5 + $0x1a8] sm:$0xff] %v810
    %875 = vst [vmem:[#allocation5 + $0x1b0] sm:$0xff] %v811
    %876 = vst [vmem:[#allocation5 + $0x1b8] sm:$0xff] %v812
    %877 = vst [vmem:[#allocation5 + $0x1c0] sm:$0xff] %v813
    %878 = vst [vmem:[#allocation5 + $0x1c8] sm:$0xff] %v814
    %879 = vst [vmem:[#allocation5 + $0x1d0] sm:$0xff] %v815
    %880 = vst [vmem:[#allocation5 + $0x1d8] sm:$0xff] %v816
    %881 = vst [vmem:[#allocation5 + $0x1e0] sm:$0xff] %v817
    %882 = vst [vmem:[#allocation5 + $0x1e8] sm:$0xff] %v818
    %883 = vst [vmem:[#allocation5 + $0x1f0] sm:$0xff] %v819
    %884 = vst [vmem:[#allocation5 + $0x1f8] sm:$0xff] %v820
    // Predicated region
    $region26: #{tpu_custom_call.1} parent=1 // pred_check
      _
    $region27: #{tpu_custom_call.1} parent=1 // pred_check_branch
      %886 = sbr.rel (0) target = $region29
    $region28: #{tpu_custom_call.1} parent=1 // pred_region
      %s888 = ssub.s32 8192, 8192
      %889 = vsyncadd [#allocation4], %s888
      %s890 = sshll.u32 [#allocation5], 4
      %s891 = int_to_ptr.vmem [resolvable:$true] %s890
      %896 = dma.vmem_to_hbm [thread:$0]  %s891, 8192, %s5, [#allocation4], 256, 256, 16
    $region29: #{tpu_custom_call.1} parent=1 // pred_fallthru
      _
    // Predicated region
    $region30: #{tpu_custom_call.1} parent=1 // pred_check
      _
    $region31: #{tpu_custom_call.1} parent=1 // pred_check_branch
      %898 = sbr.rel (0) target = $region33
    $region32: #{tpu_custom_call.1} parent=1 // pred_region
      %899 = dma.done [#allocation4], 8192
    $region33: #{tpu_custom_call.1} parent=1 // pred_fallthru
      _
    %900 = vsyncpa [#allocation3], 1
    %901 = vsyncpa [#allocation4], 1

</llo_original>
